<compile_context>
chip_gen: v7x
topology: tpu7x:2x2x1
jax: 0.10.0
libtpu: 0.0.40
codegen_flags: <defaults>
</compile_context>

<pallas_src>
import functools
import math

import jax
import jax.numpy as jnp
from jax.experimental import pallas as pl
from jax.experimental.pallas import tpu as pltpu


# --------------------------------------------------------------------------- helpers
def _round_up(x, m):
    return ((x + m - 1) // m) * m


def _gelu(v):
    # tanh-approximate GELU (see TODO above).
    return 0.5 * v * (1.0 + jnp.tanh(0.7978845608028654 * (v + 0.044715 * v * v * v)))


def _ln_padded(v, g, b, d_real, eps=1e-5):
    """LayerNorm over the first d_real lanes of a lane-padded (..., Dp) value.

    Padded lanes of v are zero by construction and g/b are zero-padded, so sums over Dp
    equal sums over d_real and padded output lanes stay exactly zero.
    """
    inv_d = 1.0 / float(d_real)
    mu = jnp.sum(v, axis=-1, keepdims=True) * inv_d
    ex2 = jnp.sum(v * v, axis=-1, keepdims=True) * inv_d
    var = jnp.maximum(ex2 - mu * mu, 0.0)
    return (v - mu) * jax.lax.rsqrt(var + eps) * g + b


def _pad2(a, shape):
    a = jnp.asarray(a, jnp.float32)
    pads = [(0, t - s) for s, t in zip(a.shape, shape)]
    return jnp.pad(a, pads)


# --------------------------------------------------------------------------- kernel 1
# y = LayerNorm(gelu(x @ W_embed + b_embed)) + PE on flattened patches (M, P) -> (M, Dp)
# The positional-embedding slab is pre-tiled on the host so each row r of a tile gets
# pe[1 + (r % N)] (tile size tm is a multiple of N, so the pattern repeats exactly).
def embed_kernel(x_ref, w_ref, b_ref, g_ref, beta_ref, pe_ref, o_ref, *, d_real):
    x = x_ref[...].astype(jnp.bfloat16)                                   # (tm, P)
    h = jnp.dot(x, w_ref[...], preferred_element_type=jnp.float32)       # (tm, Dp)
    h = h + b_ref[...]
    h = _gelu(h)
    y = _ln_padded(h, g_ref[...], beta_ref[...], d_real) + pe_ref[...]
    o_ref[...] = y.astype(o_ref.dtype)


def embed_call(xp, w, b, g, beta, pe_tiled, d_real, tm):
    M, P = xp.shape
    Dp = w.shape[1]
    Mp = _round_up(M, tm)
    if Mp != M:
        xp = jnp.pad(xp, ((0, Mp - M), (0, 0)))
    out = pl.pallas_call(
        functools.partial(embed_kernel, d_real=d_real),
        out_shape=jax.ShapeDtypeStruct((Mp, Dp), jnp.bfloat16),
        grid=(Mp // tm,),
        in_specs=[
            pl.BlockSpec((tm, P), lambda i: (i, 0)),
            pl.BlockSpec((P, Dp), lambda i: (0, 0)),
            pl.BlockSpec((1, Dp), lambda i: (0, 0)),
            pl.BlockSpec((1, Dp), lambda i: (0, 0)),
            pl.BlockSpec((1, Dp), lambda i: (0, 0)),
            pl.BlockSpec((tm, Dp), lambda i: (0, 0)),
        ],
        out_specs=pl.BlockSpec((tm, Dp), lambda i: (i, 0)),
        compiler_params=pltpu.CompilerParams(
            dimension_semantics=("parallel",),
            vmem_limit_bytes=32 * 1024 * 1024),
    )(xp, w, b, g, beta, pe_tiled)
    return out[:M]


# --------------------------------------------------------------------------- kernel 2
# Fused encoder stack (num_layers Trans_Conv approximations) + classification head.
# grid = (num_batch_blocks, num_layers).  Activation layout per batch block is
# (C, TB, L, Dp) flattened to (CLb, Dp) with CLb = C*TB*L, resident in VMEM scratch.
def encoder_stack_kernel(
        x_ref, wqkv_ref, bqkv_ref, wo_ref, w1_ref, b1_ref, w2_ref, vtab_ref,
        wsel_ref, bconv_ref, wfp_ref, bfp_ref,
        o_ref, act_ref, *, d_real, C, TB, L):
    layer = pl.program_id(1)
    CLb, Dp = act_ref.shape
    blk = TB * L

    @pl.when(layer == 0)
    def _():
        act_ref[...] = x_ref[0].astype(jnp.float32)

    # packed per-layer vector table: [bo, ln1g, ln1b, ln2g, ln2b, b2, bc(C rows), wc(C*C rows)]
    vt = vtab_ref[0]                                    # (R, Dp) f32
    bo, ln1g, ln1b = vt[0:1], vt[1:2], vt[2:3]
    ln2g, ln2b, b2 = vt[3:4], vt[4:5], vt[5:6]

    x2 = act_ref[...]                                   # (CLb, Dp) f32, zero pad lanes
    xb = x2.astype(jnp.bfloat16)

    # --- fused QKV projection (scale folded into the Q columns on the host) ---
    qkv = jnp.dot(xb, wqkv_ref[0], preferred_element_type=jnp.float32) + bqkv_ref[0]
    q = qkv[:, 0:Dp].astype(jnp.bfloat16)
    k = qkv[:, Dp:2 * Dp].astype(jnp.bfloat16)
    v = qkv[:, 2 * Dp:3 * Dp].astype(jnp.bfloat16)

    # --- block-diagonal (per-sample, per-channel) attention mask built in-kernel ---
    rid = jax.lax.broadcasted_iota(jnp.int32, (CLb, CLb), 0).astype(jnp.float32)
    cid = jax.lax.broadcasted_iota(jnp.int32, (CLb, CLb), 1).astype(jnp.float32)
    inv_l = 1.0 / float(L)
    same = jnp.floor((rid + 0.5) * inv_l) == jnp.floor((cid + 0.5) * inv_l)
    mask = jnp.where(same, 0.0, -1e9)

    s = jnp.dot(q, k.T, preferred_element_type=jnp.float32) + mask
    s = s - jnp.max(s, axis=-1, keepdims=True)
    p = jnp.exp(s)
    attn = p * pl.reciprocal(jnp.sum(p, axis=-1, keepdims=True), approx=True)
    av = jnp.dot(attn.astype(jnp.bfloat16), v, preferred_element_type=jnp.float32)
    attn_out = jnp.dot(av.astype(jnp.bfloat16), wo_ref[0],
                       preferred_element_type=jnp.float32) + bo

    h = _ln_padded(x2 + attn_out, ln1g, ln1b, d_real)

    # --- feed-forward ---
    ff = _gelu(jnp.dot(h.astype(jnp.bfloat16), w1_ref[0],
                       preferred_element_type=jnp.float32) + b1_ref[0])
    ff = jnp.dot(ff.astype(jnp.bfloat16), w2_ref[0],
                 preferred_element_type=jnp.float32) + b2
    h = _ln_padded(h + ff, ln2g, ln2b, d_real)

    # --- residual 1x1 channel-mix conv as C*C scale-and-adds (no CLxCL kron weight) ---
    blocks = []
    for co in range(C):
        acc = h[co * blk:(co + 1) * blk, :] + vt[6 + co:7 + co]          # residual + bc
        for ci in range(C):
            r = 6 + C + co * C + ci
            acc = acc + vt[r:r + 1] * h[ci * blk:(ci + 1) * blk, :]      # wc[co,ci] * h_ci
        blocks.append(acc)
    out_l = jnp.concatenate(blocks, axis=0)                              # (CLb, Dp)
    act_ref[...] = out_l

    # --- fused classification head (Conv1d C->1 k=1 on CLS rows, gelu, Linear D->4) ---
    @pl.when(layer == pl.num_programs(1) - 1)
    def _():
        hv = (jnp.dot(wsel_ref[...], out_l, preferred_element_type=jnp.float32)
              + bconv_ref[...])                          # (TB, Dp): per-sample CLS channel mix
        hv = _gelu(hv)                                   # linear_dropout: eval identity
        logits = (jnp.dot(hv, wfp_ref[...], preferred_element_type=jnp.float32)
                  + bfp_ref[...])                        # (TB, Np)
        o_ref[0] = logits.astype(o_ref.dtype)


def encoder_stack_call(y, lw, hw, *, d_real, C, TB, L):
    NB, CLb, Dp = y.shape
    NL = lw['wqkv'].shape[0]
    Hp = lw['w1'].shape[2]
    R = lw['vtab'].shape[1]
    Np = hw['wfp'].shape[1]

    def lyr(shape):   # per-layer streamed weights (re-DMA'd per layer step; amortized by TB)
        return pl.BlockSpec(shape, lambda b, l: (l, 0, 0))

    def const2(shape):
        return pl.BlockSpec(shape, lambda b, l: (0, 0))

    in_specs = [
        pl.BlockSpec((1, CLb, Dp), lambda b, l: (b, 0, 0)),   # x (bf16)
        lyr((1, Dp, 3 * Dp)),                                 # fused wqkv
        lyr((1, 1, 3 * Dp)),                                  # fused bqkv
        lyr((1, Dp, Dp)),                                     # wo
        lyr((1, Dp, Hp)),                                     # w1
        lyr((1, 1, Hp)),                                      # b1
        lyr((1, Hp, Dp)),                                     # w2
        lyr((1, R, Dp)),                                      # packed vectors / wc / bc
        const2((TB, CLb)),                                    # CLS-row selector * wconv
        const2((1, Dp)),                                      # bconv (lane-broadcast, zero-padded)
        const2((Dp, Np)),                                     # final projector weight
        const2((1, Np)),                                      # final projector bias
    ]
    out = pl.pallas_call(
        functools.partial(encoder_stack_kernel, d_real=d_real, C=C, TB=TB, L=L),
        out_shape=jax.ShapeDtypeStruct((NB, TB, Np), jnp.float32),
        grid=(NB, NL),
        in_specs=in_specs,
        out_specs=pl.BlockSpec((1, TB, Np), lambda b, l: (b, 0, 0)),
        scratch_shapes=[pltpu.VMEM((CLb, Dp), jnp.float32)],
        compiler_params=pltpu.CompilerParams(
            dimension_semantics=("parallel", "arbitrary"),
            vmem_limit_bytes=48 * 1024 * 1024),
    )(y, lw['wqkv'], lw['bqkv'], lw['wo'], lw['w1'], lw['b1'], lw['w2'], lw['vtab'],
      hw['wsel'], hw['bconv'], hw['wfp'], hw['bfp'])
    return out


# --------------------------------------------------------------------------- packing
def sinusoidal_pos_embed(max_len, d_model):
    position = jnp.arange(max_len, dtype=jnp.float32)[:, None]
    div_term = jnp.exp(jnp.arange(0, d_model, 2, dtype=jnp.float32)
                       * (-(math.log(10000.0) / d_model)))
    pe_sin = jnp.sin(position * div_term)
    pe_cos = jnp.cos(position * div_term)
    return jnp.stack([pe_sin, pe_cos], axis=-1).reshape(max_len, d_model)


def pack_layer_params(layers, *, C, D, Dp, Hp):
    """Per-layer weights stacked over a leading layer axis, lane-dense and bf16 for MXU."""
    scale = 1.0 / math.sqrt(float(D))
    R = _round_up(6 + C + C * C, 8)
    wqkv, bqkv, wo, w1, b1, w2, vtab = [], [], [], [], [], [], []
    for lp in layers:
        wq_s = jnp.asarray(lp['wq'], jnp.float32) * scale
        bq_s = jnp.asarray(lp['bq'], jnp.float32) * scale
        wqkv.append(jnp.concatenate([_pad2(wq_s, (Dp, Dp)),
                                     _pad2(lp['wk'], (Dp, Dp)),
                                     _pad2(lp['wv'], (Dp, Dp))], axis=1))
        bqkv.append(jnp.concatenate([_pad2(bq_s, (1, Dp)),
                                     _pad2(lp['bk'], (1, Dp)),
                                     _pad2(lp['bv'], (1, Dp))], axis=1))
        wo.append(_pad2(lp['wo'], (Dp, Dp)))
        w1.append(_pad2(lp['w1'], (Dp, Hp)))
        b1.append(_pad2(lp['b1'], (1, Hp)))
        w2.append(_pad2(lp['w2'], (Hp, Dp)))

        vt = jnp.zeros((R, Dp), jnp.float32)
        vt = vt.at[0].set(_pad2(lp['bo'], (1, Dp))[0])
        vt = vt.at[1].set(_pad2(lp['ln1g'], (1, Dp))[0])
        vt = vt.at[2].set(_pad2(lp['ln1b'], (1, Dp))[0])
        vt = vt.at[3].set(_pad2(lp['ln2g'], (1, Dp))[0])
        vt = vt.at[4].set(_pad2(lp['ln2b'], (1, Dp))[0])
        vt = vt.at[5].set(_pad2(lp['b2'], (1, Dp))[0])
        bc = jnp.asarray(lp['bc'], jnp.float32).reshape(C)
        vt = vt.at[6:6 + C, :D].set(jnp.broadcast_to(bc[:, None], (C, D)))  # zero past D
        wc = jnp.asarray(lp['wc'], jnp.float32).reshape(C * C)
        vt = vt.at[6 + C:6 + C + C * C, :].set(jnp.broadcast_to(wc[:, None], (C * C, Dp)))
        vtab.append(vt)
    return {
        'wqkv': jnp.stack(wqkv).astype(jnp.bfloat16),
        'bqkv': jnp.stack(bqkv),
        'wo': jnp.stack(wo).astype(jnp.bfloat16),
        'w1': jnp.stack(w1).astype(jnp.bfloat16),
        'b1': jnp.stack(b1),
        'w2': jnp.stack(w2).astype(jnp.bfloat16),
        'vtab': jnp.stack(vtab),
    }


def pack_head_params(head, *, C, TB, L, D, Dp, Np):
    CLb = C * TB * L
    wconv = jnp.asarray(head['wconv'], jnp.float32).reshape(C)
    wsel = jnp.zeros((TB, CLb), jnp.float32)
    for tb in range(TB):
        for c in range(C):
            wsel = wsel.at[tb, c * TB * L + tb * L].set(wconv[c])   # pick CLS row of (c, tb)
    bconv = jnp.asarray(head['bconv'], jnp.float32).reshape(())
    bconv_row = jnp.zeros((1, Dp), jnp.float32).at[0, :D].set(bconv)
    return {
        'wsel': wsel,
        'bconv': bconv_row,
        'wfp': _pad2(head['wfp'], (Dp, Np)),
        'bfp': _pad2(head['bfp'], (1, Np)),
    }


def init_params(key, *, patch_size, d_model, in_channels, num_layers):
    def nrm(k, shape, std=0.02):
        return (std * jax.random.normal(k, shape)).astype(jnp.float32)

    keys = jax.random.split(key, 8 + 8 * num_layers)
    ki = iter(keys)
    P, D, C = patch_size, d_model, in_channels
    params = {
        'patch_size': P, 'd_model': D,
        'embed_w': nrm(next(ki), (P, D)),
        'embed_b': nrm(next(ki), (1, D)),
        'ln_g': jnp.ones((1, D), jnp.float32),
        'ln_b': jnp.zeros((1, D), jnp.float32),
        'cls': nrm(next(ki), (1, 1, 1, D)),          # TOKEN_CLS buffer
        'layers': [],
    }
    H = 4 * D
    for _ in range(num_layers):
        params['layers'].append({
            'wq': nrm(next(ki), (D, D)), 'wk': nrm(next(ki), (D, D)),
            'wv': nrm(next(ki), (D, D)), 'wo': nrm(next(ki), (D, D)),
            'bq': jnp.zeros((1, D), jnp.float32), 'bk': jnp.zeros((1, D), jnp.float32),
            'bv': jnp.zeros((1, D), jnp.float32), 'bo': jnp.zeros((1, D), jnp.float32),
            'ln1g': jnp.ones((1, D), jnp.float32), 'ln1b': jnp.zeros((1, D), jnp.float32),
            'ln2g': jnp.ones((1, D), jnp.float32), 'ln2b': jnp.zeros((1, D), jnp.float32),
            'w1': nrm(next(ki), (D, H)), 'b1': jnp.zeros((1, H), jnp.float32),
            'w2': nrm(next(ki), (H, D)), 'b2': jnp.zeros((1, D), jnp.float32),
            'wc': nrm(next(ki), (C, C)), 'bc': jnp.zeros((C,), jnp.float32),
        })
    params['head'] = {
        'wconv': nrm(next(ki), (1, C, 1)),           # Conv1d(C, 1, k=1) weight
        'bconv': jnp.zeros((1, 1), jnp.float32),
        'wfp': nrm(next(ki), (D, 4)),                # final_projector_cls
        'bfp': jnp.zeros((1, 4), jnp.float32),
    }
    return params


# --------------------------------------------------------------------------- forward
def vq_mtm_forward(x, params):
    """x: (B, C, T) float32 -> (B, 4) classification logits."""
    B, C, T = x.shape
    P, D = params['patch_size'], params['d_model']
    assert T % P == 0
    N = T // P
    L = N + 1
    CL = C * L
    Dp = _round_up(max(D, 128), 128)
    Hp = _round_up(max(4 * D, 128), 128)
    Np = 128                                           # lane-padded num_classes
    n_cls = params['head']['wfp'].shape[1]

    # batch blocking so kernel-2 matmuls have M = C*TB*L rows
    TB = max(1, min(B, max(1, 256 // CL)))
    NB = -(-B // TB)
    Bp = NB * TB
    CLb = C * TB * L

    # positional embedding table (sinusoidal, max_len=100)
    pe = sinusoidal_pos_embed(100, D)[:L]              # (L, D)
    pe_pad = _pad2(pe, (L, Dp))

    # ---- kernel 1: patchify + embed + gelu + layernorm + PE (lane-padded, bf16 out) ----
    M = B * C * N
    lcm = (N * 8) // math.gcd(N, 8)
    tm_cap = max(lcm, (512 // lcm) * lcm)
    tm = min(tm_cap, _round_up(M, lcm))
    pe_tiled = jnp.tile(pe_pad[1:L], (tm // N, 1))     # (tm, Dp): pe[1 + (row % N)]

    xp = x.reshape(B * C * N, P).astype(jnp.float32)
    emb_w = _pad2(params['embed_w'], (P, Dp)).astype(jnp.bfloat16)
    emb_b = _pad2(params['embed_b'], (1, Dp))
    ln_g = _pad2(params['ln_g'], (1, Dp))
    ln_b = _pad2(params['ln_b'], (1, Dp))
    y = embed_call(xp, emb_w, emb_b, ln_g, ln_b, pe_tiled, D, tm)     # (M, Dp) bf16
    y = y.reshape(B, C, N, Dp)

    # ---- glue: prepend (CLS + pe[0]) row, batch-block and switch to (c, tb, l) layout ----
    cls_pe = _pad2(params['cls'].reshape(1, D) + pe[0:1], (1, Dp)).astype(jnp.bfloat16)
    cls_b = jnp.broadcast_to(cls_pe[None, None], (B, C, 1, Dp))
    y = jnp.concatenate([cls_b, y], axis=2)            # (B, C, L, Dp) bf16
    if Bp != B:
        y = jnp.pad(y, ((0, Bp - B), (0, 0), (0, 0), (0, 0)))
    y = y.reshape(NB, TB, C, L, Dp).transpose(0, 2, 1, 3, 4).reshape(NB, CLb, Dp)

    # ---- pack weights (would be cached across calls in a real deployment) ----
    lw = pack_layer_params(params['layers'], C=C, D=D, Dp=Dp, Hp=Hp)
    hw = pack_head_params(params['head'], C=C, TB=TB, L=L, D=D, Dp=Dp, Np=Np)

    # ---- kernel 2: fused encoder stack + classification head ----
    logits_p = encoder_stack_call(y, lw, hw, d_real=D, C=C, TB=TB, L=L)   # (NB, TB, Np)
    logits_p = logits_p.reshape(Bp, Np)
    return logits_p[:B, :n_cls]


# --------------------------------------------------------------------------- main
if __name__ == "__main__":
    B, C, T = 2, 4, 32
    patch_size, d_model, num_layers = 8, 32, 2

    key = jax.random.PRNGKey(0)
    k_x, k_p = jax.random.split(key)
    x = jax.random.normal(k_x, (B, C, T), dtype=jnp.float32)
    params = init_params(k_p, patch_size=patch_size, d_model=d_model,
                         in_channels=C, num_layers=num_layers)

    out = vq_mtm_forward(x, params)
    jax.block_until_ready(out)
    assert out.shape == (B, 4)
    assert bool(jnp.all(jnp.isfinite(out)))
    print("KERNEL_OK")
</pallas_src>

<mosaic_0001>
module attributes {stable_mosaic.version = 11 : i64} {
  func.func @embed_kernel(%arg0: i32, %arg1: memref<32x8xf32, #tpu.memory_space<vmem>>, %arg2: memref<8x128xbf16, #tpu.memory_space<vmem>>, %arg3: memref<1x128xf32, #tpu.memory_space<vmem>>, %arg4: memref<1x128xf32, #tpu.memory_space<vmem>>, %arg5: memref<1x128xf32, #tpu.memory_space<vmem>>, %arg6: memref<32x128xf32, #tpu.memory_space<vmem>>, %arg7: memref<32x128xbf16, #tpu.memory_space<vmem>>) attributes {dimension_semantics = [#tpu.dimension_semantics<parallel>], iteration_bounds = array<i64: 1>, scalar_prefetch = 0 : i64, scratch_operands = 0 : i64, tpu.core_type = #tpu.core_type<tc>, window_params = [{transform_indices = @transform_0, window_bounds = array<i64: 32, 8>}, {pipeline_mode = #tpu.pipeline_mode<synchronous>, transform_indices = @transform_1, window_bounds = array<i64: 8, 128>}, {pipeline_mode = #tpu.pipeline_mode<synchronous>, transform_indices = @transform_2, window_bounds = array<i64: 1, 128>}, {pipeline_mode = #tpu.pipeline_mode<synchronous>, transform_indices = @transform_3, window_bounds = array<i64: 1, 128>}, {pipeline_mode = #tpu.pipeline_mode<synchronous>, transform_indices = @transform_4, window_bounds = array<i64: 1, 128>}, {pipeline_mode = #tpu.pipeline_mode<synchronous>, transform_indices = @transform_5, window_bounds = array<i64: 32, 128>}, {transform_indices = @transform_6, window_bounds = array<i64: 32, 128>}]} {
    %c0 = arith.constant 0 : index
    %c0_0 = arith.constant 0 : index
    %0 = vector.load %arg1[%c0, %c0_0] : memref<32x8xf32, #tpu.memory_space<vmem>>, vector<32x8xf32>
    %1 = arith.truncf %0 : vector<32x8xf32> to vector<32x8xbf16>
    %c0_1 = arith.constant 0 : index
    %c0_2 = arith.constant 0 : index
    %2 = vector.load %arg2[%c0_1, %c0_2] : memref<8x128xbf16, #tpu.memory_space<vmem>>, vector<8x128xbf16>
    %cst = arith.constant dense<0.000000e+00> : vector<32x128xf32>
    %3 = tpu.matmul %1, %2, %cst {dimension_numbers = #tpu.dot_dimension_numbers<[1], [0], [0], [1], [0, 0, 1, 1], [], []>} : vector<32x8xbf16>, vector<8x128xbf16>, vector<32x128xf32> -> vector<32x128xf32>
    %c0_3 = arith.constant 0 : index
    %c0_4 = arith.constant 0 : index
    %4 = vector.load %arg3[%c0_3, %c0_4] : memref<1x128xf32, #tpu.memory_space<vmem>>, vector<1x128xf32>
    %5 = vector.broadcast %4 : vector<1x128xf32> to vector<32x128xf32>
    %6 = arith.addf %3, %5 : vector<32x128xf32>
    %cst_5 = arith.constant 5.000000e-01 : f32
    %7 = vector.broadcast %cst_5 : f32 to vector<32x128xf32>
    %8 = arith.mulf %7, %6 : vector<32x128xf32>
    %cst_6 = arith.constant 4.471500e-02 : f32
    %9 = vector.broadcast %cst_6 : f32 to vector<32x128xf32>
    %10 = arith.mulf %9, %6 : vector<32x128xf32>
    %11 = arith.mulf %10, %6 : vector<32x128xf32>
    %12 = arith.mulf %11, %6 : vector<32x128xf32>
    %13 = arith.addf %6, %12 : vector<32x128xf32>
    %cst_7 = arith.constant 0.797884583 : f32
    %14 = vector.broadcast %cst_7 : f32 to vector<32x128xf32>
    %15 = arith.mulf %14, %13 : vector<32x128xf32>
    %16 = math.tanh %15 : vector<32x128xf32>
    %cst_8 = arith.constant 1.000000e+00 : f32
    %17 = vector.broadcast %cst_8 : f32 to vector<32x128xf32>
    %18 = arith.addf %17, %16 : vector<32x128xf32>
    %19 = arith.mulf %8, %18 : vector<32x128xf32>
    %c0_9 = arith.constant 0 : index
    %c0_10 = arith.constant 0 : index
    %20 = vector.load %arg4[%c0_9, %c0_10] : memref<1x128xf32, #tpu.memory_space<vmem>>, vector<1x128xf32>
    %c0_11 = arith.constant 0 : index
    %c0_12 = arith.constant 0 : index
    %21 = vector.load %arg5[%c0_11, %c0_12] : memref<1x128xf32, #tpu.memory_space<vmem>>, vector<1x128xf32>
    %cst_13 = arith.constant dense<0.000000e+00> : vector<32xf32>
    %22 = vector.multi_reduction <add>, %19, %cst_13 [1] : vector<32x128xf32> to vector<32xf32>
    %23 = vector.shape_cast %22 : vector<32xf32> to vector<32x1xf32>
    %cst_14 = arith.constant 3.125000e-02 : f32
    %24 = vector.broadcast %cst_14 : f32 to vector<32x1xf32>
    %25 = arith.mulf %23, %24 : vector<32x1xf32>
    %26 = arith.mulf %19, %19 : vector<32x128xf32>
    %cst_15 = arith.constant dense<0.000000e+00> : vector<32xf32>
    %27 = vector.multi_reduction <add>, %26, %cst_15 [1] : vector<32x128xf32> to vector<32xf32>
    %28 = vector.shape_cast %27 : vector<32xf32> to vector<32x1xf32>
    %cst_16 = arith.constant 3.125000e-02 : f32
    %29 = vector.broadcast %cst_16 : f32 to vector<32x1xf32>
    %30 = arith.mulf %28, %29 : vector<32x1xf32>
    %31 = arith.mulf %25, %25 : vector<32x1xf32>
    %32 = arith.subf %30, %31 : vector<32x1xf32>
    %cst_17 = arith.constant 0.000000e+00 : f32
    %33 = vector.broadcast %cst_17 : f32 to vector<32x1xf32>
    %34 = arith.maximumf %32, %33 : vector<32x1xf32>
    %35 = vector.broadcast %25 : vector<32x1xf32> to vector<32x128xf32>
    %36 = arith.subf %19, %35 : vector<32x128xf32>
    %cst_18 = arith.constant 9.99999974E-6 : f32
    %37 = vector.broadcast %cst_18 : f32 to vector<32x1xf32>
    %38 = arith.addf %34, %37 : vector<32x1xf32>
    %39 = math.rsqrt %38 : vector<32x1xf32>
    %40 = vector.broadcast %39 : vector<32x1xf32> to vector<32x128xf32>
    %41 = arith.mulf %36, %40 : vector<32x128xf32>
    %42 = vector.broadcast %20 : vector<1x128xf32> to vector<32x128xf32>
    %43 = arith.mulf %41, %42 : vector<32x128xf32>
    %44 = vector.broadcast %21 : vector<1x128xf32> to vector<32x128xf32>
    %45 = arith.addf %43, %44 : vector<32x128xf32>
    %c0_19 = arith.constant 0 : index
    %c0_20 = arith.constant 0 : index
    %46 = vector.load %arg6[%c0_19, %c0_20] : memref<32x128xf32, #tpu.memory_space<vmem>>, vector<32x128xf32>
    %47 = arith.addf %45, %46 : vector<32x128xf32>
    %48 = arith.truncf %47 : vector<32x128xf32> to vector<32x128xbf16>
    %c0_21 = arith.constant 0 : index
    %c0_22 = arith.constant 0 : index
    %49 = vector.load %arg7[%c0_21, %c0_22] : memref<32x128xbf16, #tpu.memory_space<vmem>>, vector<32x128xbf16>
    tpu.vector_store %arg7[%c0_21, %c0_22], %48 {strides = array<i32>} : memref<32x128xbf16, #tpu.memory_space<vmem>>, vector<32x128xbf16>,
    return
  }
  func.func @transform_0(%arg0: i32) -> (i32, i32) {
    %c0_i32 = arith.constant 0 : i32
    %c0_i32_0 = arith.constant 0 : i32
    return %arg0, %c0_i32 : i32, i32
  }
  func.func @transform_1(%arg0: i32) -> (i32, i32) {
    %c0_i32 = arith.constant 0 : i32
    %c0_i32_0 = arith.constant 0 : i32
    %c0_i32_1 = arith.constant 0 : i32
    return %c0_i32, %c0_i32_0 : i32, i32
  }
  func.func @transform_2(%arg0: i32) -> (i32, i32) {
    %c0_i32 = arith.constant 0 : i32
    %c0_i32_0 = arith.constant 0 : i32
    %c0_i32_1 = arith.constant 0 : i32
    return %c0_i32, %c0_i32_0 : i32, i32
  }
  func.func @transform_3(%arg0: i32) -> (i32, i32) {
    %c0_i32 = arith.constant 0 : i32
    %c0_i32_0 = arith.constant 0 : i32
    %c0_i32_1 = arith.constant 0 : i32
    return %c0_i32, %c0_i32_0 : i32, i32
  }
  func.func @transform_4(%arg0: i32) -> (i32, i32) {
    %c0_i32 = arith.constant 0 : i32
    %c0_i32_0 = arith.constant 0 : i32
    %c0_i32_1 = arith.constant 0 : i32
    return %c0_i32, %c0_i32_0 : i32, i32
  }
  func.func @transform_5(%arg0: i32) -> (i32, i32) {
    %c0_i32 = arith.constant 0 : i32
    %c0_i32_0 = arith.constant 0 : i32
    %c0_i32_1 = arith.constant 0 : i32
    return %c0_i32, %c0_i32_0 : i32, i32
  }
  func.func @transform_6(%arg0: i32) -> (i32, i32) {
    %c0_i32 = arith.constant 0 : i32
    %c0_i32_0 = arith.constant 0 : i32
    return %arg0, %c0_i32 : i32, i32
  }
}

</mosaic_0001>

<llo_original>
// kernel: tpu_custom_call.1
$region0: #{tpu_custom_call.1}
  #allocation0 [shape = 'u32[]', space=smem, size = 0x4, offset = 0x4, fixed_abs, tag = 'smem constant byte address 0x4 - core index']
  #allocation1 [shape = 'u32[144,128]{1,0:T(1,128)}', space=vmem, size = 0x12000, scoped, tag = 'internal scratch']
  %s0 = inlined_call_operand.vmem [shape: f32[32,8], index: 0, kind: input, shape index: {}]
  %s1 = inlined_call_operand.vmem [shape: bf16[8,128], index: 1, kind: input, shape index: {}]
  %s2 = inlined_call_operand.vmem [shape: f32[1,128], index: 2, kind: input, shape index: {}]
  %s3 = inlined_call_operand.vmem [shape: f32[1,128], index: 3, kind: input, shape index: {}]
  %s4 = inlined_call_operand.vmem [shape: f32[1,128], index: 4, kind: input, shape index: {}]
  %s5 = inlined_call_operand.vmem [shape: f32[32,128], index: 5, kind: input, shape index: {}]
  %s6 = inlined_call_operand.hbm [shape: bf16[32,128], index: 6, kind: output, shape index: {}]
  %s7 = sld [smem:[#allocation0]]
  $region34: #{tpu_custom_call.1} parent=0
    _
  %s9 = ssub.s32 1, %s7
  %s10 = scalar_select 0, %s9, %s7
  $region1: #{tpu_custom_call.1} parent=0
    #allocation2 [shape = 'u8[8192]{0}', space=vmem, size = 0x2000, scoped, tag = 'output window, operand 0, single buffered']
    #allocation3 [shape = 's32[1]{0}', space=sflag, size = 0x4, scoped, tag = 'scoped memory for tpu_custom_call.1']
    %11 = vsyncpa [#allocation3], 0
    // Predicated region
    $region2: #{tpu_custom_call.1} parent=1 // pred_check
      _
    $region3: #{tpu_custom_call.1} parent=1 // pred_check_branch
      %13 = sbr.rel (0) target = $region5
    $region4: #{tpu_custom_call.1} parent=1 // pred_region
      _
    $region5: #{tpu_custom_call.1} parent=1 // pred_fallthru
      _
    // Predicated region
    $region6: #{tpu_custom_call.1} parent=1 // pred_check
      _
    $region7: #{tpu_custom_call.1} parent=1 // pred_check_branch
      %15 = sbr.rel (0) target = $region9
    $region8: #{tpu_custom_call.1} parent=1 // pred_region
      _
    $region9: #{tpu_custom_call.1} parent=1 // pred_fallthru
      _
    // Predicated region
    $region10: #{tpu_custom_call.1} parent=1 // pred_check
      _
    $region11: #{tpu_custom_call.1} parent=1 // pred_check_branch
      %17 = sbr.rel (0) target = $region13
    $region12: #{tpu_custom_call.1} parent=1 // pred_region
      _
    $region13: #{tpu_custom_call.1} parent=1 // pred_fallthru
      _
    // Predicated region
    $region14: #{tpu_custom_call.1} parent=1 // pred_check
      _
    $region15: #{tpu_custom_call.1} parent=1 // pred_check_branch
      %19 = sbr.rel (0) target = $region17
    $region16: #{tpu_custom_call.1} parent=1 // pred_region
      _
    $region17: #{tpu_custom_call.1} parent=1 // pred_fallthru
      _
    // Predicated region
    $region18: #{tpu_custom_call.1} parent=1 // pred_check
      _
    $region19: #{tpu_custom_call.1} parent=1 // pred_check_branch
      %21 = sbr.rel (0) target = $region21
    $region20: #{tpu_custom_call.1} parent=1 // pred_region
      _
    $region21: #{tpu_custom_call.1} parent=1 // pred_fallthru
      _
    // Predicated region
    $region22: #{tpu_custom_call.1} parent=1 // pred_check
      _
    $region23: #{tpu_custom_call.1} parent=1 // pred_check_branch
      %23 = sbr.rel (0) target = $region25
    $region24: #{tpu_custom_call.1} parent=1 // pred_region
      _
    $region25: #{tpu_custom_call.1} parent=1 // pred_fallthru
      _
    %v25 = vld [vmem:[%s0] sm:$0xff]
    %v26 = vld [vmem:[%s0 + $0x8] sm:$0xff]
    %v27 = vld [vmem:[%s0 + $0x10] sm:$0xff]
    %v28 = vld [vmem:[%s0 + $0x18] sm:$0xff]
    %v29 = vpack.c.bf16 %v26, %v25
    %v30 = vpack.c.bf16 %v28, %v27
    %v31 = vld [vmem:[%s1] sm:$0xf]
    %v32 = vld [vmem:[%s2] sm:$0x1]
    %v34 = vlaneseq
    %v35 = vshrl.u32 %v34, 7
    %v36 = vsub.s32 0, %v35
    %v37 = vrot.slane %v32, %v36
    %vm39 = vcmask 64512
    %v41 = vsel %vm39, %v29, 0
    %v44 = vsel %vm39, %v30, 0
    %vm46 = vcmask 1043456
    %v48 = vsel %vm46, %v31, 0
    %50 = vmatprep.subr.bf16.mxu0 0
    %51 = vmatpush1.bf16.msra.mxu0 %v48
    %52 = vmatprep.subr.bf16.mxu0 0
    %53 = vmatpush1.bf16.msra.mxu0 0
    %54 = vmatprep.subr.bf16.mxu0 0
    %55 = vmatpush1.bf16.msra.mxu0 0
    %56 = vmatprep.subr.bf16.mxu0 0
    %57 = vmatpush1.bf16.msra.mxu0 0
    %58 = vmatprep.subr.bf16.mxu0 0
    %59 = vmatpush1.bf16.msra.mxu0 0
    %60 = vmatprep.subr.bf16.mxu0 0
    %61 = vmatpush1.bf16.msra.mxu0 0
    %62 = vmatprep.subr.bf16.mxu0 0
    %63 = vmatpush1.bf16.msra.mxu0 0
    %64 = vmatprep.subr.bf16.mxu0 0
    %65 = vmatpush1.bf16.msra.mxu0 0
    %66 = vmatprep.subr.bf16.mxu0 0
    %67 = vmatpush1.bf16.msra.mxu0 0
    %68 = vmatprep.subr.bf16.mxu0 0
    %69 = vmatpush1.bf16.msra.mxu0 0
    %70 = vmatprep.subr.bf16.mxu0 0
    %71 = vmatpush1.bf16.msra.mxu0 0
    %72 = vmatprep.subr.bf16.mxu0 0
    %73 = vmatpush1.bf16.msra.mxu0 0
    %74 = vmatprep.subr.bf16.mxu0 0
    %75 = vmatpush1.bf16.msra.mxu0 0
    %76 = vmatprep.subr.bf16.mxu0 0
    %77 = vmatpush1.bf16.msra.mxu0 0
    %78 = vmatprep.subr.bf16.mxu0 0
    %79 = vmatpush1.bf16.msra.mxu0 0
    %80 = vmatprep.subr.bf16.mxu0 0
    %81 = vmatpush1.bf16.msra.mxu0 0
    %82 = vmatprep.mubr.bf16.mxu0 0
    %83 = vmatmul.mubr.bf16.gmra.mrb[0].mxu0 %v41
    %v84 = vpop.f32.mrb[0].mxu0
    %v85 = vadd.f32 %v37, %v84
    %v86 = vpop.f32.mrb[0].mxu0
    %v87 = vpop.f32.mrb[0].mxu0
    %v88 = vadd.f32 %v37, %v87
    %v89 = vpop.f32.mrb[0].mxu0
    %90 = vmatprep.mubr.bf16.mxu0 0
    %91 = vmatmul.mubr.bf16.gmra.mrb[0].mxu0 %v44
    %v92 = vpop.f32.mrb[0].mxu0
    %v93 = vadd.f32 %v37, %v92
    %v94 = vpop.f32.mrb[0].mxu0
    %v95 = vpop.f32.mrb[0].mxu0
    %v96 = vadd.f32 %v37, %v95
    %v97 = vpop.f32.mrb[0].mxu0
    %98 = vdwg.mxu0
    %v99 = vmul.f32 %v85, 0.5
    %v100 = vmul.f32 %v88, 0.5
    %v101 = vmul.f32 %v93, 0.5
    %v102 = vmul.f32 %v96, 0.5
    %v103 = vmul.f32 %v85, 0.044715
    %v104 = vmul.f32 %v88, 0.044715
    %v105 = vmul.f32 %v93, 0.044715
    %v106 = vmul.f32 %v96, 0.044715
    %v107 = vmul.f32 %v103, %v85
    %v108 = vmul.f32 %v104, %v88
    %v109 = vmul.f32 %v105, %v93
    %v110 = vmul.f32 %v106, %v96
    %v111 = vmul.f32 %v107, %v85
    %v112 = vmul.f32 %v108, %v88
    %v113 = vmul.f32 %v109, %v93
    %v114 = vmul.f32 %v110, %v96
    %v115 = vadd.f32 %v85, %v111
    %v116 = vadd.f32 %v88, %v112
    %v117 = vadd.f32 %v93, %v113
    %v118 = vadd.f32 %v96, %v114
    %v119 = vmul.f32 %v115, 0.7978846
    %v120 = vmul.f32 %v116, 0.7978846
    %v121 = vmul.f32 %v117, 0.7978846
    %v122 = vmul.f32 %v118, 0.7978846
    %v123 = vtanh.pop %v119
    %v124 = vtanh.pop %v120
    %v125 = vtanh.pop %v121
    %v126 = vtanh.pop %v122
    %v127 = vadd.f32 %v123, 1.0
    %v128 = vadd.f32 %v124, 1.0
    %v129 = vadd.f32 %v125, 1.0
    %v130 = vadd.f32 %v126, 1.0
    %v131 = vmul.f32 %v99, %v127
    %v132 = vmul.f32 %v100, %v128
    %v133 = vmul.f32 %v101, %v129
    %v134 = vmul.f32 %v102, %v130
    %v135 = vld [vmem:[%s3] sm:$0x1]
    %v136 = vld [vmem:[%s4] sm:$0x1]
    %137 = vadd.xlane.f32.xlu0 %v131
    %v138 = vpop.xlane.xlu0 %137
    %139 = vadd.xlane.f32.xlu0 %v132
    %v140 = vpop.xlane.xlu0 %139
    %141 = vadd.xlane.f32.xlu0 %v133
    %v142 = vpop.xlane.xlu0 %141
    %143 = vadd.xlane.f32.xlu0 %v134
    %v144 = vpop.xlane.xlu0 %143
    %v145 = vmul.f32 %v138, 0.03125
    %v146 = vmul.f32 %v140, 0.03125
    %v147 = vmul.f32 %v142, 0.03125
    %v148 = vmul.f32 %v144, 0.03125
    %v149 = vmul.f32 %v131, %v131
    %v150 = vmul.f32 %v132, %v132
    %v151 = vmul.f32 %v133, %v133
    %v152 = vmul.f32 %v134, %v134
    %153 = vadd.xlane.f32.xlu0 %v149
    %v154 = vpop.xlane.xlu0 %153
    %155 = vadd.xlane.f32.xlu0 %v150
    %v156 = vpop.xlane.xlu0 %155
    %157 = vadd.xlane.f32.xlu0 %v151
    %v158 = vpop.xlane.xlu0 %157
    %159 = vadd.xlane.f32.xlu0 %v152
    %v160 = vpop.xlane.xlu0 %159
    %v161 = vmul.f32 %v154, 0.03125
    %v162 = vmul.f32 %v156, 0.03125
    %v163 = vmul.f32 %v158, 0.03125
    %v164 = vmul.f32 %v160, 0.03125
    %v165 = vmul.f32 %v145, %v145
    %v166 = vmul.f32 %v146, %v146
    %v167 = vmul.f32 %v147, %v147
    %v168 = vmul.f32 %v148, %v148
    %v169 = vsub.f32 %v161, %v165
    %v170 = vsub.f32 %v162, %v166
    %v171 = vsub.f32 %v163, %v167
    %v172 = vsub.f32 %v164, %v168
    %v173 = vmax.f32 %v169, 0.0
    %v174 = vmax.f32 %v170, 0.0
    %v175 = vmax.f32 %v171, 0.0
    %v176 = vmax.f32 %v172, 0.0
    %v177 = vsub.f32 %v131, %v145
    %v178 = vsub.f32 %v132, %v146
    %v179 = vsub.f32 %v133, %v147
    %v180 = vsub.f32 %v134, %v148
    %v181 = vadd.f32 %v173, 1e-05
    %v182 = vadd.f32 %v174, 1e-05
    %v183 = vadd.f32 %v175, 1e-05
    %v184 = vadd.f32 %v176, 1e-05
    %v185 = vrsqrt.pop %v181
    %v186 = vrsqrt.pop %v182
    %v187 = vrsqrt.pop %v183
    %v188 = vrsqrt.pop %v184
    %v189 = vmul.f32 %v177, %v185
    %v190 = vmul.f32 %v178, %v186
    %v191 = vmul.f32 %v179, %v187
    %v192 = vmul.f32 %v180, %v188
    %v194 = vlaneseq
    %v195 = vshrl.u32 %v194, 7
    %v196 = vsub.s32 0, %v195
    %v197 = vrot.slane %v135, %v196
    %v199 = vmul.f32 %v189, %v197
    %v200 = vmul.f32 %v190, %v197
    %v201 = vmul.f32 %v191, %v197
    %v202 = vmul.f32 %v192, %v197
    %v204 = vlaneseq
    %v205 = vshrl.u32 %v204, 7
    %v206 = vsub.s32 0, %v205
    %v207 = vrot.slane %v136, %v206
    %v209 = vadd.f32 %v199, %v207
    %v210 = vadd.f32 %v200, %v207
    %v211 = vadd.f32 %v201, %v207
    %v212 = vadd.f32 %v202, %v207
    %v213 = vld [vmem:[%s5] sm:$0xff]
    %v214 = vld [vmem:[%s5 + $0x8] sm:$0xff]
    %v215 = vld [vmem:[%s5 + $0x10] sm:$0xff]
    %v216 = vld [vmem:[%s5 + $0x18] sm:$0xff]
    %v217 = vadd.f32 %v209, %v213
    %v218 = vadd.f32 %v210, %v214
    %v219 = vadd.f32 %v211, %v215
    %v220 = vadd.f32 %v212, %v216
    %v221 = vpack.c.bf16 %v218, %v217
    %v222 = vpack.c.bf16 %v220, %v219
    %v225 = vunpack.c.l.b16 %v221
    %v226 = vunpack.c.h.b16 %v221
    %v227 = vunpack.c.l.b16 %v222
    %v228 = vunpack.c.h.b16 %v222
    %v229 = vpack.c.b16 %v225, %v225
    %v230 = vpack.c.b16 %v226, %v226
    %v231 = vpack.c.b16 %v227, %v227
    %v232 = vpack.c.b16 %v228, %v228
    %237 = vst [vmem:[#allocation2] sm:$0xf] %v229
    %238 = vst [vmem:[#allocation2 + $0x4] sm:$0xf] %v230
    %239 = vst [vmem:[#allocation2 + $0x8] sm:$0xf] %v231
    %240 = vst [vmem:[#allocation2 + $0xc] sm:$0xf] %v232
    // Predicated region
    $region26: #{tpu_custom_call.1} parent=1 // pred_check
      _
    $region27: #{tpu_custom_call.1} parent=1 // pred_check_branch
      %242 = sbr.rel (0) target = $region29
    $region28: #{tpu_custom_call.1} parent=1 // pred_region
      %s244 = ssub.s32 256, 256
      %245 = vsyncadd [#allocation3], %s244
      %s246 = sshll.u32 [#allocation2], 4
      %s247 = int_to_ptr.vmem [resolvable:$true] %s246
      %252 = dma.vmem_to_hbm [thread:$0]  %s247, 256, %s6, [#allocation3], 64, 64, 4
    $region29: #{tpu_custom_call.1} parent=1 // pred_fallthru
      _
    // Predicated region
    $region30: #{tpu_custom_call.1} parent=1 // pred_check
      _
    $region31: #{tpu_custom_call.1} parent=1 // pred_check_branch
      %254 = sbr.rel (0) target = $region33
    $region32: #{tpu_custom_call.1} parent=1 // pred_region
      %255 = dma.done [#allocation3], 256
    $region33: #{tpu_custom_call.1} parent=1 // pred_fallthru
      _
    %256 = vsyncpa [#allocation3], 1

</llo_original>
